<compile_context>
chip_gen: v7x
topology: tpu7x:2x2x1
jax: 0.10.0
libtpu: 0.0.40
codegen_flags: <defaults>
</compile_context>

<pallas_src>
import jax
import jax.numpy as jnp
from jax.experimental import pallas as pl
from jax.experimental.pallas import tpu as pltpu


# ----------------------------------------------------------------------------
# Pass 1: tiled sum-pool (fp32 accumulate) + excitation MLP in the finalize
# ----------------------------------------------------------------------------
def _make_pool_excite_kernel(has_noise: bool, reduce_axis: int, inv_n: float):
    def kernel(*refs):
        if has_noise:
            (x_ref, w1_ref, b1_ref, w2_ref, b2_ref,
             noise_ref, wn_ref, bn_ref, s_ref, acc_ref) = refs
        else:
            (x_ref, w1_ref, b1_ref, w2_ref, b2_ref, s_ref, acc_ref) = refs

        @pl.when(pl.program_id(0) == 0)
        def _init():
            acc_ref[...] = jnp.zeros_like(acc_ref)

        # Per-tile partial sum, accumulated in fp32 (XLU reduction).
        acc_ref[...] += jnp.sum(x_ref[...].astype(jnp.float32),
                                axis=reduce_axis)

        @pl.when(pl.program_id(0) == pl.num_programs(0) - 1)
        def _finalize():
            y = acc_ref[...] * inv_n                              # mean, [B, C]
            if has_noise:
                y = y + jnp.dot(noise_ref[...].astype(jnp.float32),
                                wn_ref[...].astype(jnp.float32),
                                preferred_element_type=jnp.float32)
                y = y + bn_ref[...].astype(jnp.float32)
            h = jnp.dot(y, w1_ref[...].astype(jnp.float32),
                        preferred_element_type=jnp.float32)
            h = jnp.maximum(h + b1_ref[...].astype(jnp.float32), 0.0)
            s = jnp.dot(h, w2_ref[...].astype(jnp.float32),
                        preferred_element_type=jnp.float32)
            s = jax.nn.sigmoid(s + b2_ref[...].astype(jnp.float32))  # [B, C]
            s_ref[...] = s.astype(s_ref.dtype)

    return kernel


# ----------------------------------------------------------------------------
# Pass 2: tiled, parallel, lane-dense scale (HBM-bandwidth-bound hot loop)
# ----------------------------------------------------------------------------
def _make_scale_kernel(reduce_axis: int):
    def kernel(x_ref, s_ref, o_ref):
        # No fp32 upcast of x: multiply in the input dtype (bf16-native on
        # v6e/v7x; fp32 stays fp32).
        o_ref[...] = x_ref[...] * jnp.expand_dims(s_ref[...], reduce_axis)
    return kernel


# ----------------------------------------------------------------------------
# Wrapper
# ----------------------------------------------------------------------------
def _pick_tile(extent, unit_bytes, granularity, budget_bytes):
    """Largest power-of-2 multiple of `granularity` that divides `extent` and
    whose block fits `budget_bytes`; falls back to the full extent (always a
    legal block size)."""
    divisors = []
    t = granularity
    while t <= extent:
        if extent % t == 0:
            divisors.append(t)
        t *= 2
    if not divisors:
        return extent
    fitting = [t for t in divisors if t * unit_bytes <= budget_bytes]
    return max(fitting) if fitting else min(divisors)


def squeeze_excite_block(x, params, noise_embedding=None, *,
                         block_bytes=1 << 20):
    """Pallas implementation of SqueezeExciteBlock.forward.

    x: [B, C, H, W] (NCHW) or [B, S, F].
    params: fc1/fc2 (and optional noise_proj) weights & biases in the PyTorch
            Linear convention (weight [out, in], bias [out]).
    """
    orig_shape = x.shape
    dtype = x.dtype
    itemsize = x.dtype.itemsize

    if x.ndim == 4:
        B, C, H, W = x.shape
        xk = x.reshape(B, C, H * W)             # pooled axis on lanes
        reduce_axis, n_red, feat = 2, H * W, C
        tile = _pick_tile(n_red, B * C * itemsize, 128, block_bytes)
        x_block = (B, C, tile)
        x_index = lambda i: (0, 0, i)
    elif x.ndim == 3:
        B, S, Ft = x.shape
        xk = x                                   # native layout, no transposes
        reduce_axis, n_red, feat = 1, S, Ft
        tile = _pick_tile(n_red, B * Ft * itemsize, 8, block_bytes)
        x_block = (B, tile, Ft)
        x_index = lambda i: (0, i, 0)
    else:
        raise ValueError(f"expected 3-D or 4-D input, got shape {x.shape}")

    n_tiles = n_red // tile
    x_bytes = xk.size * itemsize
    s_bytes = B * feat * itemsize

    # PyTorch Linear convention: weight [out, in]; pre-transpose once so the
    # kernel does plain y @ W (tiny arrays, finalize-only).
    w1 = jnp.transpose(params["fc1_w"])          # [C, C//r]
    b1 = params["fc1_b"][None, :]                # [1, C//r]
    w2 = jnp.transpose(params["fc2_w"])          # [C//r, C]
    b2 = params["fc2_b"][None, :]                # [1, C]

    has_noise = noise_embedding is not None

    def full2d(a):
        return pl.BlockSpec(a.shape, lambda i: (0, 0))

    inputs = [xk, w1, b1, w2, b2]
    in_specs = [pl.BlockSpec(x_block, x_index),
                full2d(w1), full2d(b1), full2d(w2), full2d(b2)]
    if has_noise:
        wn = jnp.transpose(params["noise_w"])    # [Nd, C]
        bn = params["noise_b"][None, :]          # [1, C]
        inputs += [noise_embedding, wn, bn]
        in_specs += [full2d(noise_embedding), full2d(wn), full2d(bn)]

    # ---- pass 1: streamed pooled-sum + excitation MLP (finalize) -----------
    s = pl.pallas_call(
        _make_pool_excite_kernel(has_noise, reduce_axis, 1.0 / n_red),
        out_shape=jax.ShapeDtypeStruct((B, feat), dtype),
        grid=(n_tiles,),
        in_specs=in_specs,
        out_specs=pl.BlockSpec((B, feat), lambda i: (0, 0)),
        scratch_shapes=[pltpu.VMEM((B, feat), jnp.float32)],
        compiler_params=pltpu.CompilerParams(
            dimension_semantics=("arbitrary",)),
        cost_estimate=pl.CostEstimate(
            flops=xk.size + 8 * B * feat * feat,
            transcendentals=B * feat,
            bytes_accessed=x_bytes + s_bytes),
    )(*inputs)

    # ---- pass 2: streamed, parallel, lane-dense scale -----------------------
    out = pl.pallas_call(
        _make_scale_kernel(reduce_axis),
        out_shape=jax.ShapeDtypeStruct(xk.shape, dtype),
        grid=(n_tiles,),
        in_specs=[pl.BlockSpec(x_block, x_index),
                  pl.BlockSpec((B, feat), lambda i: (0, 0))],
        out_specs=pl.BlockSpec(x_block, x_index),
        compiler_params=pltpu.CompilerParams(
            dimension_semantics=("parallel",)),
        cost_estimate=pl.CostEstimate(
            flops=xk.size,
            transcendentals=0,
            bytes_accessed=2 * x_bytes + s_bytes),
    )(xk, s)

    return out.reshape(orig_shape)


# ----------------------------------------------------------------------------
# Pure-JAX reference for verification
# ----------------------------------------------------------------------------
def squeeze_excite_ref(x, params, noise_embedding=None):
    if x.ndim == 4:
        B, C, H, W = x.shape
        y = x.reshape(B, C, -1).mean(axis=2)
    else:
        y = x.mean(axis=1)
    if noise_embedding is not None:
        y = y + noise_embedding @ params["noise_w"].T + params["noise_b"]
    y = jax.nn.relu(y @ params["fc1_w"].T + params["fc1_b"])
    y = jax.nn.sigmoid(y @ params["fc2_w"].T + params["fc2_b"])
    if x.ndim == 4:
        return x * y[:, :, None, None]
    return x * y[:, None, :]


# ----------------------------------------------------------------------------
if __name__ == "__main__":
    key = jax.random.PRNGKey(0)
    dim, reduction, noise_dim = 64, 16, 128
    hidden = dim // reduction                                    # 4
    B, H, W = 2, 16, 16
    S = 48

    keys = jax.random.split(key, 9)
    params = {
        "fc1_w": 0.1 * jax.random.normal(keys[0], (hidden, dim), jnp.float32),
        "fc1_b": 0.1 * jax.random.normal(keys[1], (hidden,), jnp.float32),
        "fc2_w": 0.1 * jax.random.normal(keys[2], (dim, hidden), jnp.float32),
        "fc2_b": 0.1 * jax.random.normal(keys[3], (dim,), jnp.float32),
        "noise_w": 0.1 * jax.random.normal(keys[4], (dim, noise_dim), jnp.float32),
        "noise_b": 0.1 * jax.random.normal(keys[5], (dim,), jnp.float32),
    }

    x4 = jax.random.normal(keys[6], (B, dim, H, W), jnp.float32)      # NCHW
    x3 = jax.random.normal(keys[7], (B, S, dim), jnp.float32)         # [B,S,F]
    noise_embedding = jax.random.normal(keys[8], (B, noise_dim), jnp.float32)

    # 4-D path with noise embedding (default tiling).
    out = jax.block_until_ready(squeeze_excite_block(x4, params, noise_embedding))
    ref = squeeze_excite_ref(x4, params, noise_embedding)
    assert out.shape == x4.shape
    assert jnp.allclose(out, ref, atol=1e-5, rtol=1e-5)

    # 4-D path without noise, forcing small blocks to exercise the multi-tile
    # accumulate (pass 1) and parallel scale (pass 2) grids.
    out2 = jax.block_until_ready(
        squeeze_excite_block(x4, params, None, block_bytes=32 * 1024))
    ref2 = squeeze_excite_ref(x4, params, None)
    assert jnp.allclose(out2, ref2, atol=1e-5, rtol=1e-5)

    # 3-D [B, S, F] path: native layout (no wrapper transposes), pooled axis
    # on sublanes, multi-tile grid.
    out3 = jax.block_until_ready(squeeze_excite_block(x3, params, noise_embedding))
    ref3 = squeeze_excite_ref(x3, params, noise_embedding)
    assert out3.shape == x3.shape
    assert jnp.allclose(out3, ref3, atol=1e-5, rtol=1e-5)

    print("KERNEL_OK")
</pallas_src>

<mosaic_0001>
module attributes {stable_mosaic.version = 11 : i64} {
  func.func @kernel(%arg0: i32, %arg1: memref<2x64x256xf32, #tpu.memory_space<vmem>>, %arg2: memref<64x4xf32, #tpu.memory_space<vmem>>, %arg3: memref<1x4xf32, #tpu.memory_space<vmem>>, %arg4: memref<4x64xf32, #tpu.memory_space<vmem>>, %arg5: memref<1x64xf32, #tpu.memory_space<vmem>>, %arg6: memref<2x128xf32, #tpu.memory_space<vmem>>, %arg7: memref<128x64xf32, #tpu.memory_space<vmem>>, %arg8: memref<1x64xf32, #tpu.memory_space<vmem>>, %arg9: memref<2x64xf32, #tpu.memory_space<vmem>>, %arg10: memref<2x64xf32, #tpu.memory_space<vmem>>) attributes {dimension_semantics = [#tpu.dimension_semantics<arbitrary>], iteration_bounds = array<i64: 1>, scalar_prefetch = 0 : i64, scratch_operands = 1 : i64, tpu.core_type = #tpu.core_type<tc>, window_params = [{transform_indices = @transform_0, window_bounds = array<i64: 2, 64, 256>}, {pipeline_mode = #tpu.pipeline_mode<synchronous>, transform_indices = @transform_1, window_bounds = array<i64: 64, 4>}, {pipeline_mode = #tpu.pipeline_mode<synchronous>, transform_indices = @transform_2, window_bounds = array<i64: 1, 4>}, {pipeline_mode = #tpu.pipeline_mode<synchronous>, transform_indices = @transform_3, window_bounds = array<i64: 4, 64>}, {pipeline_mode = #tpu.pipeline_mode<synchronous>, transform_indices = @transform_4, window_bounds = array<i64: 1, 64>}, {pipeline_mode = #tpu.pipeline_mode<synchronous>, transform_indices = @transform_5, window_bounds = array<i64: 2, 128>}, {pipeline_mode = #tpu.pipeline_mode<synchronous>, transform_indices = @transform_6, window_bounds = array<i64: 128, 64>}, {pipeline_mode = #tpu.pipeline_mode<synchronous>, transform_indices = @transform_7, window_bounds = array<i64: 1, 64>}, {pipeline_mode = #tpu.pipeline_mode<synchronous>, transform_indices = @transform_8, window_bounds = array<i64: 2, 64>}]} {
    %c0_i32 = arith.constant 0 : i32
    %0 = arith.cmpi eq, %arg0, %c0_i32 : i32
    %1 = arith.extui %0 : i1 to i32
    %c0_i32_0 = arith.constant 0 : i32
    %2 = arith.cmpi ne, %1, %c0_i32_0 : i32
    scf.if %2 {
      %cst_9 = arith.constant 0.000000e+00 : f32
      %11 = vector.broadcast %cst_9 : f32 to vector<2x64xf32>
      %c0_10 = arith.constant 0 : index
      %c0_11 = arith.constant 0 : index
      %12 = vector.load %arg10[%c0_10, %c0_11] : memref<2x64xf32, #tpu.memory_space<vmem>>, vector<2x64xf32>
      tpu.vector_store %arg10[%c0_10, %c0_11], %11 {strides = array<i32>} : memref<2x64xf32, #tpu.memory_space<vmem>>, vector<2x64xf32>,
    } else {
    }
    %c0 = arith.constant 0 : index
    %c0_1 = arith.constant 0 : index
    %3 = vector.load %arg10[%c0, %c0_1] : memref<2x64xf32, #tpu.memory_space<vmem>>, vector<2x64xf32>
    %c0_2 = arith.constant 0 : index
    %c0_3 = arith.constant 0 : index
    %c0_4 = arith.constant 0 : index
    %4 = vector.load %arg1[%c0_2, %c0_3, %c0_4] : memref<2x64x256xf32, #tpu.memory_space<vmem>>, vector<2x64x256xf32>
    %cst = arith.constant dense<0.000000e+00> : vector<2x64xf32>
    %5 = vector.multi_reduction <add>, %4, %cst [2] : vector<2x64x256xf32> to vector<2x64xf32>
    %6 = arith.addf %3, %5 : vector<2x64xf32>
    %c0_5 = arith.constant 0 : index
    %c0_6 = arith.constant 0 : index
    %7 = vector.load %arg10[%c0_5, %c0_6] : memref<2x64xf32, #tpu.memory_space<vmem>>, vector<2x64xf32>
    tpu.vector_store %arg10[%c0_5, %c0_6], %6 {strides = array<i32>} : memref<2x64xf32, #tpu.memory_space<vmem>>, vector<2x64xf32>,
    %c0_i32_7 = arith.constant 0 : i32
    %8 = arith.cmpi eq, %arg0, %c0_i32_7 : i32
    %9 = arith.extui %8 : i1 to i32
    %c0_i32_8 = arith.constant 0 : i32
    %10 = arith.cmpi ne, %9, %c0_i32_8 : i32
    scf.if %10 {
      %c0_9 = arith.constant 0 : index
      %c0_10 = arith.constant 0 : index
      %11 = vector.load %arg10[%c0_9, %c0_10] : memref<2x64xf32, #tpu.memory_space<vmem>>, vector<2x64xf32>
      %cst_11 = arith.constant 3.906250e-03 : f32
      %12 = vector.broadcast %cst_11 : f32 to vector<2x64xf32>
      %13 = arith.mulf %11, %12 : vector<2x64xf32>
      %c0_12 = arith.constant 0 : index
      %c0_13 = arith.constant 0 : index
      %14 = vector.load %arg6[%c0_12, %c0_13] : memref<2x128xf32, #tpu.memory_space<vmem>>, vector<2x128xf32>
      %c0_14 = arith.constant 0 : index
      %c0_15 = arith.constant 0 : index
      %15 = vector.load %arg7[%c0_14, %c0_15] : memref<128x64xf32, #tpu.memory_space<vmem>>, vector<128x64xf32>
      %cst_16 = arith.constant dense<0.000000e+00> : vector<2x64xf32>
      %16 = tpu.matmul %14, %15, %cst_16 {dimension_numbers = #tpu.dot_dimension_numbers<[1], [0], [0], [1], [0, 0, 1, 1], [], []>} : vector<2x128xf32>, vector<128x64xf32>, vector<2x64xf32> -> vector<2x64xf32>
      %17 = arith.addf %13, %16 : vector<2x64xf32>
      %c0_17 = arith.constant 0 : index
      %c0_18 = arith.constant 0 : index
      %18 = vector.load %arg8[%c0_17, %c0_18] : memref<1x64xf32, #tpu.memory_space<vmem>>, vector<1x64xf32>
      %19 = vector.broadcast %18 : vector<1x64xf32> to vector<2x64xf32>
      %20 = arith.addf %17, %19 : vector<2x64xf32>
      %c0_19 = arith.constant 0 : index
      %c0_20 = arith.constant 0 : index
      %21 = vector.load %arg2[%c0_19, %c0_20] : memref<64x4xf32, #tpu.memory_space<vmem>>, vector<64x4xf32>
      %cst_21 = arith.constant dense<0.000000e+00> : vector<2x4xf32>
      %22 = tpu.matmul %20, %21, %cst_21 {dimension_numbers = #tpu.dot_dimension_numbers<[1], [0], [0], [1], [0, 0, 1, 1], [], []>} : vector<2x64xf32>, vector<64x4xf32>, vector<2x4xf32> -> vector<2x4xf32>
      %c0_22 = arith.constant 0 : index
      %c0_23 = arith.constant 0 : index
      %23 = vector.load %arg3[%c0_22, %c0_23] : memref<1x4xf32, #tpu.memory_space<vmem>>, vector<1x4xf32>
      %24 = vector.broadcast %23 : vector<1x4xf32> to vector<2x4xf32>
      %25 = arith.addf %22, %24 : vector<2x4xf32>
      %cst_24 = arith.constant 0.000000e+00 : f32
      %26 = vector.broadcast %cst_24 : f32 to vector<2x4xf32>
      %27 = arith.maximumf %25, %26 : vector<2x4xf32>
      %c0_25 = arith.constant 0 : index
      %c0_26 = arith.constant 0 : index
      %28 = vector.load %arg4[%c0_25, %c0_26] : memref<4x64xf32, #tpu.memory_space<vmem>>, vector<4x64xf32>
      %cst_27 = arith.constant dense<0.000000e+00> : vector<2x64xf32>
      %29 = tpu.matmul %27, %28, %cst_27 {dimension_numbers = #tpu.dot_dimension_numbers<[1], [0], [0], [1], [0, 0, 1, 1], [], []>} : vector<2x4xf32>, vector<4x64xf32>, vector<2x64xf32> -> vector<2x64xf32>
      %c0_28 = arith.constant 0 : index
      %c0_29 = arith.constant 0 : index
      %30 = vector.load %arg5[%c0_28, %c0_29] : memref<1x64xf32, #tpu.memory_space<vmem>>, vector<1x64xf32>
      %31 = vector.broadcast %30 : vector<1x64xf32> to vector<2x64xf32>
      %32 = arith.addf %29, %31 : vector<2x64xf32>
      %33 = arith.negf %32 : vector<2x64xf32>
      %34 = math.exp %33 : vector<2x64xf32>
      %cst_30 = arith.constant 1.000000e+00 : f32
      %35 = vector.broadcast %cst_30 : f32 to vector<2x64xf32>
      %36 = arith.addf %35, %34 : vector<2x64xf32>
      %37 = arith.divf %35, %36 : vector<2x64xf32>
      %c0_31 = arith.constant 0 : index
      %c0_32 = arith.constant 0 : index
      %38 = vector.load %arg9[%c0_31, %c0_32] : memref<2x64xf32, #tpu.memory_space<vmem>>, vector<2x64xf32>
      tpu.vector_store %arg9[%c0_31, %c0_32], %37 {strides = array<i32>} : memref<2x64xf32, #tpu.memory_space<vmem>>, vector<2x64xf32>,
    } else {
    }
    return
  }
  func.func @transform_0(%arg0: i32) -> (i32, i32, i32) {
    %c0_i32 = arith.constant 0 : i32
    %c0_i32_0 = arith.constant 0 : i32
    %c0_i32_1 = arith.constant 0 : i32
    return %c0_i32, %c0_i32_0, %arg0 : i32, i32, i32
  }
  func.func @transform_1(%arg0: i32) -> (i32, i32) {
    %c0_i32 = arith.constant 0 : i32
    %c0_i32_0 = arith.constant 0 : i32
    %c0_i32_1 = arith.constant 0 : i32
    return %c0_i32, %c0_i32_0 : i32, i32
  }
  func.func @transform_2(%arg0: i32) -> (i32, i32) {
    %c0_i32 = arith.constant 0 : i32
    %c0_i32_0 = arith.constant 0 : i32
    %c0_i32_1 = arith.constant 0 : i32
    return %c0_i32, %c0_i32_0 : i32, i32
  }
  func.func @transform_3(%arg0: i32) -> (i32, i32) {
    %c0_i32 = arith.constant 0 : i32
    %c0_i32_0 = arith.constant 0 : i32
    %c0_i32_1 = arith.constant 0 : i32
    return %c0_i32, %c0_i32_0 : i32, i32
  }
  func.func @transform_4(%arg0: i32) -> (i32, i32) {
    %c0_i32 = arith.constant 0 : i32
    %c0_i32_0 = arith.constant 0 : i32
    %c0_i32_1 = arith.constant 0 : i32
    return %c0_i32, %c0_i32_0 : i32, i32
  }
  func.func @transform_5(%arg0: i32) -> (i32, i32) {
    %c0_i32 = arith.constant 0 : i32
    %c0_i32_0 = arith.constant 0 : i32
    %c0_i32_1 = arith.constant 0 : i32
    return %c0_i32, %c0_i32_0 : i32, i32
  }
  func.func @transform_6(%arg0: i32) -> (i32, i32) {
    %c0_i32 = arith.constant 0 : i32
    %c0_i32_0 = arith.constant 0 : i32
    %c0_i32_1 = arith.constant 0 : i32
    return %c0_i32, %c0_i32_0 : i32, i32
  }
  func.func @transform_7(%arg0: i32) -> (i32, i32) {
    %c0_i32 = arith.constant 0 : i32
    %c0_i32_0 = arith.constant 0 : i32
    %c0_i32_1 = arith.constant 0 : i32
    return %c0_i32, %c0_i32_0 : i32, i32
  }
  func.func @transform_8(%arg0: i32) -> (i32, i32) {
    %c0_i32 = arith.constant 0 : i32
    %c0_i32_0 = arith.constant 0 : i32
    %c0_i32_1 = arith.constant 0 : i32
    return %c0_i32, %c0_i32_0 : i32, i32
  }
}

</mosaic_0001>

<llo_original>
// kernel: tpu_custom_call.1
$region0: #{tpu_custom_call.1}
  #allocation0 [shape = 'u32[]', space=smem, size = 0x4, offset = 0x4, fixed_abs, tag = 'smem constant byte address 0x4 - core index']
  #allocation1 [shape = 'u32[144,128]{1,0:T(1,128)}', space=vmem, size = 0x12000, scoped, tag = 'internal scratch']
  #allocation2 [shape = 'f32[2,64]{1,0:T(2,128)}', space=vmem, size = 0x400, scoped, tag = 'scratch operand']
  %s0 = inlined_call_operand.vmem [shape: f32[2,64,256], index: 0, kind: input, shape index: {}]
  %s1 = inlined_call_operand.vmem [shape: f32[64,4], index: 1, kind: input, shape index: {}]
  %s2 = inlined_call_operand.vmem [shape: f32[1,4], index: 2, kind: input, shape index: {}]
  %s3 = inlined_call_operand.vmem [shape: f32[4,64], index: 3, kind: input, shape index: {}]
  %s4 = inlined_call_operand.vmem [shape: f32[1,64], index: 4, kind: input, shape index: {}]
  %s5 = inlined_call_operand.vmem [shape: f32[2,128], index: 5, kind: input, shape index: {}]
  %s6 = inlined_call_operand.vmem [shape: f32[128,64], index: 6, kind: input, shape index: {}]
  %s7 = inlined_call_operand.vmem [shape: f32[1,64], index: 7, kind: input, shape index: {}]
  %s8 = inlined_call_operand.hbm [shape: f32[2,64], index: 8, kind: output, shape index: {}]
  %s9 = sld [smem:[#allocation0]]
  $region50: #{tpu_custom_call.1} parent=0
    _
  %s11 = ssub.s32 1, %s9
  %s12 = scalar_select 0, %s11, %s9
  $region1: #{tpu_custom_call.1} parent=0
    #allocation3 [shape = 'u8[1024]{0}', space=vmem, size = 0x400, scoped, tag = 'output window, operand 0, single buffered']
    #allocation4 [shape = 's32[1]{0}', space=sflag, size = 0x4, scoped, tag = 'scoped memory for tpu_custom_call.1']
    %13 = vsyncpa [#allocation4], 0
    // Predicated region
    $region2: #{tpu_custom_call.1} parent=1 // pred_check
      _
    $region3: #{tpu_custom_call.1} parent=1 // pred_check_branch
      %15 = sbr.rel (0) target = $region5
    $region4: #{tpu_custom_call.1} parent=1 // pred_region
      _
    $region5: #{tpu_custom_call.1} parent=1 // pred_fallthru
      _
    // Predicated region
    $region6: #{tpu_custom_call.1} parent=1 // pred_check
      _
    $region7: #{tpu_custom_call.1} parent=1 // pred_check_branch
      %17 = sbr.rel (0) target = $region9
    $region8: #{tpu_custom_call.1} parent=1 // pred_region
      _
    $region9: #{tpu_custom_call.1} parent=1 // pred_fallthru
      _
    // Predicated region
    $region10: #{tpu_custom_call.1} parent=1 // pred_check
      _
    $region11: #{tpu_custom_call.1} parent=1 // pred_check_branch
      %19 = sbr.rel (0) target = $region13
    $region12: #{tpu_custom_call.1} parent=1 // pred_region
      _
    $region13: #{tpu_custom_call.1} parent=1 // pred_fallthru
      _
    // Predicated region
    $region14: #{tpu_custom_call.1} parent=1 // pred_check
      _
    $region15: #{tpu_custom_call.1} parent=1 // pred_check_branch
      %21 = sbr.rel (0) target = $region17
    $region16: #{tpu_custom_call.1} parent=1 // pred_region
      _
    $region17: #{tpu_custom_call.1} parent=1 // pred_fallthru
      _
    // Predicated region
    $region18: #{tpu_custom_call.1} parent=1 // pred_check
      _
    $region19: #{tpu_custom_call.1} parent=1 // pred_check_branch
      %23 = sbr.rel (0) target = $region21
    $region20: #{tpu_custom_call.1} parent=1 // pred_region
      _
    $region21: #{tpu_custom_call.1} parent=1 // pred_fallthru
      _
    // Predicated region
    $region22: #{tpu_custom_call.1} parent=1 // pred_check
      _
    $region23: #{tpu_custom_call.1} parent=1 // pred_check_branch
      %25 = sbr.rel (0) target = $region25
    $region24: #{tpu_custom_call.1} parent=1 // pred_region
      _
    $region25: #{tpu_custom_call.1} parent=1 // pred_fallthru
      _
    // Predicated region
    $region26: #{tpu_custom_call.1} parent=1 // pred_check
      _
    $region27: #{tpu_custom_call.1} parent=1 // pred_check_branch
      %27 = sbr.rel (0) target = $region29
    $region28: #{tpu_custom_call.1} parent=1 // pred_region
      _
    $region29: #{tpu_custom_call.1} parent=1 // pred_fallthru
      _
    // Predicated region
    $region30: #{tpu_custom_call.1} parent=1 // pred_check
      _
    $region31: #{tpu_custom_call.1} parent=1 // pred_check_branch
      %29 = sbr.rel (0) target = $region33
    $region32: #{tpu_custom_call.1} parent=1 // pred_region
      _
    $region33: #{tpu_custom_call.1} parent=1 // pred_fallthru
      _
    %p30 = scmp.eq.s32.totalorder 0, 0
    // Predicated region
    $region34: #{tpu_custom_call.1} parent=1 // pred_check
      %p31 = pneg %p30
    $region35: #{tpu_custom_call.1} parent=1 // pred_check_branch
      %33 = sbr.rel (%p31) target = $region37
    $region36: #{tpu_custom_call.1} parent=1 // pred_region
      %vm34 = vcmask 517120
      %35 = vst.msk [vmem:[#allocation2] sm:$0x3] %vm34, 0.0
    $region37: #{tpu_custom_call.1} parent=1 // pred_fallthru
      _
    %v36 = vld [vmem:[#allocation2] sm:$0x3]
    %v37 = vld [vmem:[%s0] sm:$0xff]
    %v38 = vld [vmem:[%s0 + $0x8] sm:$0xff]
    %v39 = vld [vmem:[%s0 + $0x10] sm:$0xff]
    %v40 = vld [vmem:[%s0 + $0x18] sm:$0xff]
    %v41 = vld [vmem:[%s0 + $0x20] sm:$0xff]
    %v42 = vld [vmem:[%s0 + $0x28] sm:$0xff]
    %v43 = vld [vmem:[%s0 + $0x30] sm:$0xff]
    %v44 = vld [vmem:[%s0 + $0x38] sm:$0xff]
    %v45 = vld [vmem:[%s0 + $0x40] sm:$0xff]
    %v46 = vld [vmem:[%s0 + $0x48] sm:$0xff]
    %v47 = vld [vmem:[%s0 + $0x50] sm:$0xff]
    %v48 = vld [vmem:[%s0 + $0x58] sm:$0xff]
    %v49 = vld [vmem:[%s0 + $0x60] sm:$0xff]
    %v50 = vld [vmem:[%s0 + $0x68] sm:$0xff]
    %v51 = vld [vmem:[%s0 + $0x70] sm:$0xff]
    %v52 = vld [vmem:[%s0 + $0x78] sm:$0xff]
    %v53 = vld [vmem:[%s0 + $0x80] sm:$0xff]
    %v54 = vld [vmem:[%s0 + $0x88] sm:$0xff]
    %v55 = vld [vmem:[%s0 + $0x90] sm:$0xff]
    %v56 = vld [vmem:[%s0 + $0x98] sm:$0xff]
    %v57 = vld [vmem:[%s0 + $0xa0] sm:$0xff]
    %v58 = vld [vmem:[%s0 + $0xa8] sm:$0xff]
    %v59 = vld [vmem:[%s0 + $0xb0] sm:$0xff]
    %v60 = vld [vmem:[%s0 + $0xb8] sm:$0xff]
    %v61 = vld [vmem:[%s0 + $0xc0] sm:$0xff]
    %v62 = vld [vmem:[%s0 + $0xc8] sm:$0xff]
    %v63 = vld [vmem:[%s0 + $0xd0] sm:$0xff]
    %v64 = vld [vmem:[%s0 + $0xd8] sm:$0xff]
    %v65 = vld [vmem:[%s0 + $0xe0] sm:$0xff]
    %v66 = vld [vmem:[%s0 + $0xe8] sm:$0xff]
    %v67 = vld [vmem:[%s0 + $0xf0] sm:$0xff]
    %v68 = vld [vmem:[%s0 + $0xf8] sm:$0xff]
    %v69 = vadd.f32 %v37, %v38
    %70 = vadd.xlane.f32.xlu0 %v69
    %v71 = vpop.xlane.xlu0 %70
    %v72 = vadd.f32 %v39, %v40
    %73 = vadd.xlane.f32.xlu0 %v72
    %v74 = vpop.xlane.xlu0 %73
    %v75 = vadd.f32 %v41, %v42
    %76 = vadd.xlane.f32.xlu0 %v75
    %v77 = vpop.xlane.xlu0 %76
    %v78 = vadd.f32 %v43, %v44
    %79 = vadd.xlane.f32.xlu0 %v78
    %v80 = vpop.xlane.xlu0 %79
    %v81 = vadd.f32 %v45, %v46
    %82 = vadd.xlane.f32.xlu0 %v81
    %v83 = vpop.xlane.xlu0 %82
    %v84 = vadd.f32 %v47, %v48
    %85 = vadd.xlane.f32.xlu0 %v84
    %v86 = vpop.xlane.xlu0 %85
    %v87 = vadd.f32 %v49, %v50
    %88 = vadd.xlane.f32.xlu0 %v87
    %v89 = vpop.xlane.xlu0 %88
    %v90 = vadd.f32 %v51, %v52
    %91 = vadd.xlane.f32.xlu0 %v90
    %v92 = vpop.xlane.xlu0 %91
    %v93 = vadd.f32 %v53, %v54
    %94 = vadd.xlane.f32.xlu0 %v93
    %v95 = vpop.xlane.xlu0 %94
    %v96 = vadd.f32 %v55, %v56
    %97 = vadd.xlane.f32.xlu0 %v96
    %v98 = vpop.xlane.xlu0 %97
    %v99 = vadd.f32 %v57, %v58
    %100 = vadd.xlane.f32.xlu0 %v99
    %v101 = vpop.xlane.xlu0 %100
    %v102 = vadd.f32 %v59, %v60
    %103 = vadd.xlane.f32.xlu0 %v102
    %v104 = vpop.xlane.xlu0 %103
    %v105 = vadd.f32 %v61, %v62
    %106 = vadd.xlane.f32.xlu0 %v105
    %v107 = vpop.xlane.xlu0 %106
    %v108 = vadd.f32 %v63, %v64
    %109 = vadd.xlane.f32.xlu0 %v108
    %v110 = vpop.xlane.xlu0 %109
    %v111 = vadd.f32 %v65, %v66
    %112 = vadd.xlane.f32.xlu0 %v111
    %v113 = vpop.xlane.xlu0 %112
    %v114 = vadd.f32 %v67, %v68
    %115 = vadd.xlane.f32.xlu0 %v114
    %v116 = vpop.xlane.xlu0 %115
    %v133 = vlaneseq
    %v134 = vand.u32 %v133, 127
    %v135 = vlaneseq
    %v136 = vshrl.u32 %v135, 7
    %v137 = vsub.s32 %v134, %v136
    %v138 = vrot.slane %v71, %v137
    %v139 = vadd.s32 %v134, 4294967288
    %v140 = vlaneseq
    %v141 = vshrl.u32 %v140, 7
    %v142 = vsub.s32 %v139, %v141
    %v143 = vrot.slane %v74, %v142
    %vm144 = vcmask 130112
    %v145 = vsel %vm144, %v143, %v138
    %v146 = vadd.s32 %v134, 4294967280
    %v147 = vlaneseq
    %v148 = vshrl.u32 %v147, 7
    %v149 = vsub.s32 %v146, %v148
    %v150 = vrot.slane %v77, %v149
    %vm151 = vcmask 195712
    %v152 = vsel %vm151, %v150, %v145
    %v153 = vadd.s32 %v134, 4294967272
    %v154 = vlaneseq
    %v155 = vshrl.u32 %v154, 7
    %v156 = vsub.s32 %v153, %v155
    %v157 = vrot.slane %v80, %v156
    %vm158 = vcmask 261312
    %v159 = vsel %vm158, %v157, %v152
    %v160 = vadd.s32 %v134, 4294967264
    %v161 = vlaneseq
    %v162 = vshrl.u32 %v161, 7
    %v163 = vsub.s32 %v160, %v162
    %v164 = vrot.slane %v83, %v163
    %vm165 = vcmask 326912
    %v166 = vsel %vm165, %v164, %v159
    %v167 = vadd.s32 %v134, 4294967256
    %v168 = vlaneseq
    %v169 = vshrl.u32 %v168, 7
    %v170 = vsub.s32 %v167, %v169
    %v171 = vrot.slane %v86, %v170
    %vm172 = vcmask 392512
    %v173 = vsel %vm172, %v171, %v166
    %v174 = vadd.s32 %v134, 4294967248
    %v175 = vlaneseq
    %v176 = vshrl.u32 %v175, 7
    %v177 = vsub.s32 %v174, %v176
    %v178 = vrot.slane %v89, %v177
    %vm179 = vcmask 458112
    %v180 = vsel %vm179, %v178, %v173
    %v181 = vadd.s32 %v134, 4294967240
    %v182 = vlaneseq
    %v183 = vshrl.u32 %v182, 7
    %v184 = vsub.s32 %v181, %v183
    %v185 = vrot.slane %v92, %v184
    %vm186 = vcmask 523712
    %v187 = vsel %vm186, %v185, %v180
    %v188 = vlaneseq
    %v189 = vshrl.u32 %v188, 7
    %v190 = vsub.s32 %v134, %v189
    %v191 = vrot.slane %v95, %v190
    %v192 = vlaneseq
    %v193 = vshrl.u32 %v192, 7
    %v194 = vsub.s32 %v139, %v193
    %v195 = vrot.slane %v98, %v194
    %v196 = vsel %vm144, %v195, %v191
    %v197 = vlaneseq
    %v198 = vshrl.u32 %v197, 7
    %v199 = vsub.s32 %v146, %v198
    %v200 = vrot.slane %v101, %v199
    %v201 = vsel %vm151, %v200, %v196
    %v202 = vlaneseq
    %v203 = vshrl.u32 %v202, 7
    %v204 = vsub.s32 %v153, %v203
    %v205 = vrot.slane %v104, %v204
    %v206 = vsel %vm158, %v205, %v201
    %v207 = vlaneseq
    %v208 = vshrl.u32 %v207, 7
    %v209 = vsub.s32 %v160, %v208
    %v210 = vrot.slane %v107, %v209
    %v211 = vsel %vm165, %v210, %v206
    %v212 = vlaneseq
    %v213 = vshrl.u32 %v212, 7
    %v214 = vsub.s32 %v167, %v213
    %v215 = vrot.slane %v110, %v214
    %v216 = vsel %vm172, %v215, %v211
    %v217 = vlaneseq
    %v218 = vshrl.u32 %v217, 7
    %v219 = vsub.s32 %v174, %v218
    %v220 = vrot.slane %v113, %v219
    %v221 = vsel %vm179, %v220, %v216
    %v222 = vlaneseq
    %v223 = vshrl.u32 %v222, 7
    %v224 = vsub.s32 %v181, %v223
    %v225 = vrot.slane %v116, %v224
    %v226 = vsel %vm186, %v225, %v221
    %vm227 = vcmask 1041409
    %v228 = vsel %vm227, %v226, %v187
    %v230 = vadd.f32 %v36, %v228
    %vm231 = vcmask 517120
    %232 = vst.msk [vmem:[#allocation2] sm:$0x3] %vm231, %v230
    // Predicated region
    $region38: #{tpu_custom_call.1} parent=1 // pred_check
      %p233 = pneg %p30
    $region39: #{tpu_custom_call.1} parent=1 // pred_check_branch
      %235 = sbr.rel (%p233) target = $region41
    $region40: #{tpu_custom_call.1} parent=1 // pred_region
      %v236 = vld [vmem:[#allocation2] sm:$0x3]
      %v237 = vmul.f32 %v236, 0.00390625
      %v238 = vld [vmem:[%s5] sm:$0x3]
      %v239 = vld [vmem:[%s6] sm:$0xff]
      %v240 = vld [vmem:[%s6 + $0x8] sm:$0xff]
      %v241 = vld [vmem:[%s6 + $0x10] sm:$0xff]
      %v242 = vld [vmem:[%s6 + $0x18] sm:$0xff]
      %v243 = vld [vmem:[%s6 + $0x20] sm:$0xff]
      %v244 = vld [vmem:[%s6 + $0x28] sm:$0xff]
      %v245 = vld [vmem:[%s6 + $0x30] sm:$0xff]
      %v246 = vld [vmem:[%s6 + $0x38] sm:$0xff]
      %v247 = vld [vmem:[%s6 + $0x40] sm:$0xff]
      %v248 = vld [vmem:[%s6 + $0x48] sm:$0xff]
      %v249 = vld [vmem:[%s6 + $0x50] sm:$0xff]
      %v250 = vld [vmem:[%s6 + $0x58] sm:$0xff]
      %v251 = vld [vmem:[%s6 + $0x60] sm:$0xff]
      %v252 = vld [vmem:[%s6 + $0x68] sm:$0xff]
      %v253 = vld [vmem:[%s6 + $0x70] sm:$0xff]
      %v254 = vld [vmem:[%s6 + $0x78] sm:$0xff]
      %255 = vmatprep.subr.mxu0 0.0
      %256 = vmatpush1.msra.mxu0 %v239
      %257 = vmatprep.subr.mxu0 0.0
      %258 = vmatpush1.msra.mxu0 %v240
      %259 = vmatprep.subr.mxu0 0.0
      %260 = vmatpush1.msra.mxu0 %v241
      %261 = vmatprep.subr.mxu0 0.0
      %262 = vmatpush1.msra.mxu0 %v242
      %263 = vmatprep.subr.mxu0 0.0
      %264 = vmatpush1.msra.mxu0 %v243
      %265 = vmatprep.subr.mxu0 0.0
      %266 = vmatpush1.msra.mxu0 %v244
      %267 = vmatprep.subr.mxu0 0.0
      %268 = vmatpush1.msra.mxu0 %v245
      %269 = vmatprep.subr.mxu0 0.0
      %270 = vmatpush1.msra.mxu0 %v246
      %271 = vmatprep.subr.mxu0 0.0
      %272 = vmatpush1.msra.mxu0 %v247
      %273 = vmatprep.subr.mxu0 0.0
      %274 = vmatpush1.msra.mxu0 %v248
      %275 = vmatprep.subr.mxu0 0.0
      %276 = vmatpush1.msra.mxu0 %v249
      %277 = vmatprep.subr.mxu0 0.0
      %278 = vmatpush1.msra.mxu0 %v250
      %279 = vmatprep.subr.mxu0 0.0
      %280 = vmatpush1.msra.mxu0 %v251
      %281 = vmatprep.subr.mxu0 0.0
      %282 = vmatpush1.msra.mxu0 %v252
      %283 = vmatprep.subr.mxu0 0.0
      %284 = vmatpush1.msra.mxu0 %v253
      %285 = vmatprep.subr.mxu0 0.0
      %286 = vmatpush1.msra.mxu0 %v254
      %287 = vmatprep.subr.mxu0 0.0
      %288 = vmatpush1.msra.mxu0 0.0
      %289 = vmatprep.subr.mxu0 0.0
      %290 = vmatpush1.msra.mxu0 0.0
      %291 = vmatprep.subr.mxu0 0.0
      %292 = vmatpush1.msra.mxu0 0.0
      %293 = vmatprep.subr.mxu0 0.0
      %294 = vmatpush1.msra.mxu0 0.0
      %295 = vmatprep.subr.mxu0 0.0
      %296 = vmatpush1.msra.mxu0 0.0
      %297 = vmatprep.subr.mxu0 0.0
      %298 = vmatpush1.msra.mxu0 0.0
      %299 = vmatprep.subr.mxu0 0.0
      %300 = vmatpush1.msra.mxu0 0.0
      %301 = vmatprep.subr.mxu0 0.0
      %302 = vmatpush1.msra.mxu0 0.0
      %303 = vmatprep.subr.mxu0 0.0
      %304 = vmatpush1.msra.mxu0 0.0
      %305 = vmatprep.subr.mxu0 0.0
      %306 = vmatpush1.msra.mxu0 0.0
      %307 = vmatprep.subr.mxu0 0.0
      %308 = vmatpush1.msra.mxu0 0.0
      %309 = vmatprep.subr.mxu0 0.0
      %310 = vmatpush1.msra.mxu0 0.0
      %311 = vmatprep.subr.mxu0 0.0
      %312 = vmatpush1.msra.mxu0 0.0
      %313 = vmatprep.subr.mxu0 0.0
      %314 = vmatpush1.msra.mxu0 0.0
      %315 = vmatprep.subr.mxu0 0.0
      %316 = vmatpush1.msra.mxu0 0.0
      %317 = vmatprep.subr.mxu0 0.0
      %318 = vmatpush1.msra.mxu0 0.0
      %319 = vmatprep.mubr.f32.mxu0 0.0
      %320 = vmatmul.mubr.f32.gmra.mrb[0].mxu0 %v238
      %v321 = vpop.f32.mrb[0].mxu0
      %v322 = vadd.f32 0.0, %v321
      %v323 = vpop.f32.mrb[0].mxu0
      %324 = vdwg.mxu0
      %v325 = vadd.f32 %v237, %v322
      %v326 = vld [vmem:[%s7] sm:$0x1]
      %v328 = vlaneseq
      %v329 = vshrl.u32 %v328, 7
      %v330 = vsub.s32 0, %v329
      %v331 = vrot.slane %v326, %v330
      %v333 = vadd.f32 %v325, %v331
      %v334 = vld [vmem:[%s1] sm:$0xff]
      %v335 = vld [vmem:[%s1 + $0x8] sm:$0xff]
      %v336 = vld [vmem:[%s1 + $0x10] sm:$0xff]
      %v337 = vld [vmem:[%s1 + $0x18] sm:$0xff]
      %v338 = vld [vmem:[%s1 + $0x20] sm:$0xff]
      %v339 = vld [vmem:[%s1 + $0x28] sm:$0xff]
      %v340 = vld [vmem:[%s1 + $0x30] sm:$0xff]
      %v341 = vld [vmem:[%s1 + $0x38] sm:$0xff]
      %v342 = vld [vmem:[%s2] sm:$0x1]
      %v344 = vlaneseq
      %v345 = vshrl.u32 %v344, 7
      %v346 = vsub.s32 0, %v345
      %v347 = vrot.slane %v342, %v346
      %vm349 = vcmask 523264
      %v351 = vsel %vm349, %v333, 0
      %353 = vmatprep.subr.mxu0 0.0
      %354 = vmatpush1.msra.mxu0 %v334
      %355 = vmatprep.subr.mxu0 0.0
      %356 = vmatpush1.msra.mxu0 %v335
      %357 = vmatprep.subr.mxu0 0.0
      %358 = vmatpush1.msra.mxu0 %v336
      %359 = vmatprep.subr.mxu0 0.0
      %360 = vmatpush1.msra.mxu0 %v337
      %361 = vmatprep.subr.mxu0 0.0
      %362 = vmatpush1.msra.mxu0 %v338
      %363 = vmatprep.subr.mxu0 0.0
      %364 = vmatpush1.msra.mxu0 %v339
      %365 = vmatprep.subr.mxu0 0.0
      %366 = vmatpush1.msra.mxu0 %v340
      %367 = vmatprep.subr.mxu0 0.0
      %368 = vmatpush1.msra.mxu0 %v341
      %369 = vmatprep.subr.mxu0 0.0
      %370 = vmatpush1.msra.mxu0 0.0
      %371 = vmatprep.subr.mxu0 0.0
      %372 = vmatpush1.msra.mxu0 0.0
      %373 = vmatprep.subr.mxu0 0.0
      %374 = vmatpush1.msra.mxu0 0.0
      %375 = vmatprep.subr.mxu0 0.0
      %376 = vmatpush1.msra.mxu0 0.0
      %377 = vmatprep.subr.mxu0 0.0
      %378 = vmatpush1.msra.mxu0 0.0
      %379 = vmatprep.subr.mxu0 0.0
      %380 = vmatpush1.msra.mxu0 0.0
      %381 = vmatprep.subr.mxu0 0.0
      %382 = vmatpush1.msra.mxu0 0.0
      %383 = vmatprep.subr.mxu0 0.0
      %384 = vmatpush1.msra.mxu0 0.0
      %385 = vmatprep.subr.mxu0 0.0
      %386 = vmatpush1.msra.mxu0 0.0
      %387 = vmatprep.subr.mxu0 0.0
      %388 = vmatpush1.msra.mxu0 0.0
      %389 = vmatprep.subr.mxu0 0.0
      %390 = vmatpush1.msra.mxu0 0.0
      %391 = vmatprep.subr.mxu0 0.0
      %392 = vmatpush1.msra.mxu0 0.0
      %393 = vmatprep.subr.mxu0 0.0
      %394 = vmatpush1.msra.mxu0 0.0
      %395 = vmatprep.subr.mxu0 0.0
      %396 = vmatpush1.msra.mxu0 0.0
      %397 = vmatprep.subr.mxu0 0.0
      %398 = vmatpush1.msra.mxu0 0.0
      %399 = vmatprep.subr.mxu0 0.0
      %400 = vmatpush1.msra.mxu0 0.0
      %401 = vmatprep.subr.mxu0 0.0
      %402 = vmatpush1.msra.mxu0 0.0
      %403 = vmatprep.subr.mxu0 0.0
      %404 = vmatpush1.msra.mxu0 0.0
      %405 = vmatprep.subr.mxu0 0.0
      %406 = vmatpush1.msra.mxu0 0.0
      %407 = vmatprep.subr.mxu0 0.0
      %408 = vmatpush1.msra.mxu0 0.0
      %409 = vmatprep.subr.mxu0 0.0
      %410 = vmatpush1.msra.mxu0 0.0
      %411 = vmatprep.subr.mxu0 0.0
      %412 = vmatpush1.msra.mxu0 0.0
      %413 = vmatprep.subr.mxu0 0.0
      %414 = vmatpush1.msra.mxu0 0.0
      %415 = vmatprep.subr.mxu0 0.0
      %416 = vmatpush1.msra.mxu0 0.0
      %417 = vmatprep.mubr.f32.mxu0 0.0
      %418 = vmatmul.mubr.f32.gmra.mrb[0].mxu0 %v351
      %v419 = vpop.f32.mrb[0].mxu0
      %v420 = vadd.f32 %v347, %v419
      %v421 = vpop.f32.mrb[0].mxu0
      %422 = vdwg.mxu0
      %v423 = vmax.f32 %v420, 0.0
      %v424 = vld [vmem:[%s3] sm:$0xf]
      %v425 = vld [vmem:[%s4] sm:$0x1]
      %v427 = vlaneseq
      %v428 = vshrl.u32 %v427, 7
      %v429 = vsub.s32 0, %v428
      %v430 = vrot.slane %v425, %v429
      %vm432 = vcmask 31744
      %v434 = vsel %vm432, %v423, 0
      %vm436 = vcmask 1043456
      %v438 = vsel %vm436, %v424, 0
      %440 = vmatprep.subr.mxu0 0.0
      %441 = vmatpush1.msra.mxu0 %v438
      %442 = vmatprep.subr.mxu0 0.0
      %443 = vmatpush1.msra.mxu0 0.0
      %444 = vmatprep.subr.mxu0 0.0
      %445 = vmatpush1.msra.mxu0 0.0
      %446 = vmatprep.subr.mxu0 0.0
      %447 = vmatpush1.msra.mxu0 0.0
      %448 = vmatprep.subr.mxu0 0.0
      %449 = vmatpush1.msra.mxu0 0.0
      %450 = vmatprep.subr.mxu0 0.0
      %451 = vmatpush1.msra.mxu0 0.0
      %452 = vmatprep.subr.mxu0 0.0
      %453 = vmatpush1.msra.mxu0 0.0
      %454 = vmatprep.subr.mxu0 0.0
      %455 = vmatpush1.msra.mxu0 0.0
      %456 = vmatprep.subr.mxu0 0.0
      %457 = vmatpush1.msra.mxu0 0.0
      %458 = vmatprep.subr.mxu0 0.0
      %459 = vmatpush1.msra.mxu0 0.0
      %460 = vmatprep.subr.mxu0 0.0
      %461 = vmatpush1.msra.mxu0 0.0
      %462 = vmatprep.subr.mxu0 0.0
      %463 = vmatpush1.msra.mxu0 0.0
      %464 = vmatprep.subr.mxu0 0.0
      %465 = vmatpush1.msra.mxu0 0.0
      %466 = vmatprep.subr.mxu0 0.0
      %467 = vmatpush1.msra.mxu0 0.0
      %468 = vmatprep.subr.mxu0 0.0
      %469 = vmatpush1.msra.mxu0 0.0
      %470 = vmatprep.subr.mxu0 0.0
      %471 = vmatpush1.msra.mxu0 0.0
      %472 = vmatprep.subr.mxu0 0.0
      %473 = vmatpush1.msra.mxu0 0.0
      %474 = vmatprep.subr.mxu0 0.0
      %475 = vmatpush1.msra.mxu0 0.0
      %476 = vmatprep.subr.mxu0 0.0
      %477 = vmatpush1.msra.mxu0 0.0
      %478 = vmatprep.subr.mxu0 0.0
      %479 = vmatpush1.msra.mxu0 0.0
      %480 = vmatprep.subr.mxu0 0.0
      %481 = vmatpush1.msra.mxu0 0.0
      %482 = vmatprep.subr.mxu0 0.0
      %483 = vmatpush1.msra.mxu0 0.0
      %484 = vmatprep.subr.mxu0 0.0
      %485 = vmatpush1.msra.mxu0 0.0
      %486 = vmatprep.subr.mxu0 0.0
      %487 = vmatpush1.msra.mxu0 0.0
      %488 = vmatprep.subr.mxu0 0.0
      %489 = vmatpush1.msra.mxu0 0.0
      %490 = vmatprep.subr.mxu0 0.0
      %491 = vmatpush1.msra.mxu0 0.0
      %492 = vmatprep.subr.mxu0 0.0
      %493 = vmatpush1.msra.mxu0 0.0
      %494 = vmatprep.subr.mxu0 0.0
      %495 = vmatpush1.msra.mxu0 0.0
      %496 = vmatprep.subr.mxu0 0.0
      %497 = vmatpush1.msra.mxu0 0.0
      %498 = vmatprep.subr.mxu0 0.0
      %499 = vmatpush1.msra.mxu0 0.0
      %500 = vmatprep.subr.mxu0 0.0
      %501 = vmatpush1.msra.mxu0 0.0
      %502 = vmatprep.subr.mxu0 0.0
      %503 = vmatpush1.msra.mxu0 0.0
      %504 = vmatprep.mubr.f32.mxu0 0.0
      %505 = vmatmul.mubr.f32.gmra.mrb[0].mxu0 %v434
      %v506 = vpop.f32.mrb[0].mxu0
      %v507 = vadd.f32 %v430, %v506
      %v508 = vpop.f32.mrb[0].mxu0
      %509 = vdwg.mxu0
      %v510 = vxor.u32 %v507, 2147483648
      %v511 = vmul.f32 %v510, 1.442695
      %v512 = vpow.pop %v511
      %v513 = vadd.f32 %v512, 1.0
      %v514 = vrcp.pop %v513
      %v515 = vmul.f32 1.0, %v514
      %516 = vst.msk [vmem:[#allocation3] sm:$0x3] %vm231, %v515
    $region41: #{tpu_custom_call.1} parent=1 // pred_fallthru
      _
    // Predicated region
    $region42: #{tpu_custom_call.1} parent=1 // pred_check
      _
    $region43: #{tpu_custom_call.1} parent=1 // pred_check_branch
      %518 = sbr.rel (0) target = $region45
    $region44: #{tpu_custom_call.1} parent=1 // pred_region
      %s520 = ssub.s32 32, 32
      %521 = vsyncadd [#allocation4], %s520
      %s523 = sshll.u32 [#allocation3], 4
      %s524 = int_to_ptr.vmem [resolvable:$true] %s523
      %526 = dma.vmem_to_hbm [thread:$0]  %s524, 32, %s8, [#allocation4]
    $region45: #{tpu_custom_call.1} parent=1 // pred_fallthru
      _
    // Predicated region
    $region46: #{tpu_custom_call.1} parent=1 // pred_check
      _
    $region47: #{tpu_custom_call.1} parent=1 // pred_check_branch
      %528 = sbr.rel (0) target = $region49
    $region48: #{tpu_custom_call.1} parent=1 // pred_region
      %529 = dma.done [#allocation4], 32
    $region49: #{tpu_custom_call.1} parent=1 // pred_fallthru
      _
    %530 = vsyncpa [#allocation4], 1

</llo_original>
